<compile_context>
chip_gen: v7x
topology: tpu7x:2x2x1
jax: 0.10.0
libtpu: 0.0.40
codegen_flags: <defaults>
</compile_context>

<pallas_src>
import functools

import jax
import jax.numpy as jnp
from jax.experimental import pallas as pl
from jax.experimental.pallas import tpu as pltpu


def _round_up(x, m):
    return ((x + m - 1) // m) * m


def _choose_row_tile(n, c, itemsize):
    """Pick a row tile: ~2 MiB per logits block (double-buffered -> ~4 MiB),
    multiple of 8 sublanes, no bigger than the (padded) problem."""
    target_bytes = 2 * 1024 * 1024
    tm = max(8, target_bytes // max(1, c * itemsize))
    tm = min(int(tm), _round_up(n, 8))
    tm = max(8, (tm // 8) * 8)  # sublane multiple
    return tm


def _infonce_kernel(logits_ref, targets_ref, out_ref, acc_ref, *,
                    inv_temperature, n_valid):
    i = pl.program_id(0)

    @pl.when(i == 0)
    def _init():
        acc_ref[0] = jnp.zeros((), dtype=jnp.float32)

    # [TM, C] block, upcast + temperature scaling in f32.
    logits = logits_ref[...].astype(jnp.float32) * inv_temperature
    tm, c = logits.shape

    # Numerically stable log-sum-exp per row.
    row_max = jnp.max(logits, axis=-1, keepdims=True)                 # [TM, 1]
    lse = jnp.log(jnp.sum(jnp.exp(logits - row_max),
                          axis=-1, keepdims=True)) + row_max          # [TM, 1]

    # Gather target logit via compare+select (no cast+multiply).
    tgt = targets_ref[...]                                            # [TM, 1] int32
    col = jax.lax.broadcasted_iota(jnp.int32, (tm, c), 1)             # [TM, C]
    tgt_logit = jnp.sum(jnp.where(col == tgt, logits, 0.0),
                        axis=-1, keepdims=True)                       # [TM, 1]

    per_sample = lse - tgt_logit                                      # [TM, 1]

    # Mask rows that are padding (global row index >= true N).
    row_ids = i * tm + jax.lax.broadcasted_iota(jnp.int32, (tm, 1), 0)
    per_sample = jnp.where(row_ids < n_valid, per_sample, 0.0)

    acc_ref[0] += jnp.sum(per_sample)

    @pl.when(i == pl.num_programs(0) - 1)
    def _finalize():
        # reduction='mean' over the true (unpadded) batch size.
        out_ref[0] = acc_ref[0] / float(n_valid)


def info_nce_loss(inputs, targets, temperature=0.1):
    """inputs: [N, C] float logits (f32 or bf16); targets: [N] int class indices."""
    n, c = inputs.shape
    itemsize = jnp.dtype(inputs.dtype).itemsize
    tm = _choose_row_tile(n, c, itemsize)
    n_pad = _round_up(n, tm)

    targets_i32 = targets.astype(jnp.int32)
    if n_pad != n:
        inputs = jnp.pad(inputs, ((0, n_pad - n), (0, 0)))
        targets_i32 = jnp.pad(targets_i32, (0, n_pad - n))
    targets_2d = targets_i32.reshape(n_pad, 1)

    num_blocks = n_pad // tm
    kernel = functools.partial(
        _infonce_kernel,
        inv_temperature=float(1.0 / temperature),  # static Python float, no capture
        n_valid=int(n),
    )

    out = pl.pallas_call(
        kernel,
        out_shape=jax.ShapeDtypeStruct((1,), jnp.float32),
        grid_spec=pltpu.PrefetchScalarGridSpec(
            num_scalar_prefetch=0,
            grid=(num_blocks,),
            in_specs=[
                pl.BlockSpec((tm, c), lambda i: (i, 0)),
                pl.BlockSpec((tm, 1), lambda i: (i, 0)),
            ],
            out_specs=pl.BlockSpec(memory_space=pltpu.MemorySpace.SMEM),
            scratch_shapes=[pltpu.SMEM((1,), jnp.float32)],
        ),
        compiler_params=pltpu.CompilerParams(
            dimension_semantics=("arbitrary",),  # row axis carries the loss sum
        ),
    )(inputs, targets_2d)
    return out[0]


def _reference_loss(inputs, targets, temperature=0.1):
    logits = inputs.astype(jnp.float32) / temperature
    logz = jax.nn.logsumexp(logits, axis=-1)
    tgt_logit = jnp.take_along_axis(
        logits, targets.astype(jnp.int32)[:, None], axis=-1)[:, 0]
    return jnp.mean(logz - tgt_logit)


if __name__ == "__main__":
    key = jax.random.PRNGKey(0)
    k_in, k_tgt = jax.random.split(key)

    N, C = 8, 32  # batch of 8 samples, 32 "classes" (contrastive candidates)
    inputs = jax.random.normal(k_in, (N, C), dtype=jnp.float32)
    targets = jax.random.randint(k_tgt, (N,), 0, C, dtype=jnp.int32)

    loss = info_nce_loss(inputs, targets, temperature=0.1)
    loss = jax.block_until_ready(loss)

    ref = jax.block_until_ready(_reference_loss(inputs, targets, temperature=0.1))
    assert jnp.allclose(loss, ref, rtol=1e-5, atol=1e-5), (loss, ref)

    print("KERNEL_OK")
</pallas_src>

<mosaic_0001>
module attributes {stable_mosaic.version = 11 : i64} {
  func.func @_infonce_kernel(%arg0: i32, %arg1: memref<8x32xf32, #tpu.memory_space<vmem>>, %arg2: memref<8x1xi32, #tpu.memory_space<vmem>>, %arg3: memref<1xf32, #tpu.memory_space<smem>>, %arg4: memref<1xf32, #tpu.memory_space<smem>>) attributes {dimension_semantics = [#tpu.dimension_semantics<arbitrary>], iteration_bounds = array<i64: 1>, scalar_prefetch = 0 : i64, scratch_operands = 1 : i64, tpu.core_type = #tpu.core_type<tc>, window_params = [{transform_indices = @transform_0, window_bounds = array<i64: 8, 32>}, {transform_indices = @transform_1, window_bounds = array<i64: 8, 1>}, {transform_indices = @transform_2, window_bounds = array<i64: 1>}]} {
    %c0_i32 = arith.constant 0 : i32
    %0 = arith.cmpi eq, %arg0, %c0_i32 : i32
    %1 = arith.extui %0 : i1 to i32
    %c0_i32_0 = arith.constant 0 : i32
    %2 = arith.cmpi ne, %1, %c0_i32_0 : i32
    scf.if %2 {
      %cst_15 = arith.constant 0.000000e+00 : f32
      %c0_16 = arith.constant 0 : index
      %42 = memref.load %arg4[%c0_16] : memref<1xf32, #tpu.memory_space<smem>>
      memref.store %cst_15, %arg4[%c0_16] : memref<1xf32, #tpu.memory_space<smem>>
    } else {
    }
    %c0 = arith.constant 0 : index
    %c0_1 = arith.constant 0 : index
    %3 = vector.load %arg1[%c0, %c0_1] : memref<8x32xf32, #tpu.memory_space<vmem>>, vector<8x32xf32>
    %cst = arith.constant 1.000000e+01 : f32
    %4 = vector.broadcast %cst : f32 to vector<8x32xf32>
    %5 = arith.mulf %3, %4 : vector<8x32xf32>
    %cst_2 = arith.constant dense<0xFF800000> : vector<8xf32>
    %6 = vector.multi_reduction <maximumf>, %5, %cst_2 [1] : vector<8x32xf32> to vector<8xf32>
    %7 = vector.shape_cast %6 : vector<8xf32> to vector<8x1xf32>
    %8 = vector.broadcast %7 : vector<8x1xf32> to vector<8x32xf32>
    %9 = arith.subf %5, %8 : vector<8x32xf32>
    %10 = math.exp %9 : vector<8x32xf32>
    %cst_3 = arith.constant dense<0.000000e+00> : vector<8xf32>
    %11 = vector.multi_reduction <add>, %10, %cst_3 [1] : vector<8x32xf32> to vector<8xf32>
    %12 = vector.shape_cast %11 : vector<8xf32> to vector<8x1xf32>
    %13 = math.log %12 : vector<8x1xf32>
    %14 = arith.addf %13, %7 : vector<8x1xf32>
    %c0_4 = arith.constant 0 : index
    %c0_5 = arith.constant 0 : index
    %15 = vector.load %arg2[%c0_4, %c0_5] : memref<8x1xi32, #tpu.memory_space<vmem>>, vector<8x1xi32>
    %16 = tpu.iota {dimensions = array<i32: 1>} : vector<8x32xi32>
    %17 = vector.broadcast %15 : vector<8x1xi32> to vector<8x32xi32>
    %18 = arith.cmpi eq, %16, %17 : vector<8x32xi32>
    %cst_6 = arith.constant 0.000000e+00 : f32
    %19 = vector.broadcast %cst_6 : f32 to vector<8x32xf32>
    %20 = arith.select %18, %5, %19 : vector<8x32xi1>, vector<8x32xf32>
    %cst_7 = arith.constant dense<0.000000e+00> : vector<8xf32>
    %21 = vector.multi_reduction <add>, %20, %cst_7 [1] : vector<8x32xf32> to vector<8xf32>
    %22 = vector.shape_cast %21 : vector<8xf32> to vector<8x1xf32>
    %23 = arith.subf %14, %22 : vector<8x1xf32>
    %c8_i32 = arith.constant 8 : i32
    %24 = arith.muli %arg0, %c8_i32 : i32
    %25 = tpu.iota {dimensions = array<i32: 0>} : vector<8x1xi32>
    %26 = vector.broadcast %24 : i32 to vector<8x1xi32>
    %27 = arith.addi %26, %25 : vector<8x1xi32>
    %c8_i32_8 = arith.constant 8 : i32
    %28 = vector.broadcast %c8_i32_8 : i32 to vector<8x1xi32>
    %29 = arith.cmpi slt, %27, %28 : vector<8x1xi32>
    %cst_9 = arith.constant 0.000000e+00 : f32
    %30 = vector.broadcast %cst_9 : f32 to vector<8x1xf32>
    %31 = arith.select %29, %23, %30 : vector<8x1xi1>, vector<8x1xf32>
    %c0_10 = arith.constant 0 : index
    %32 = memref.load %arg4[%c0_10] : memref<1xf32, #tpu.memory_space<smem>>
    %33 = vector.shape_cast %31 : vector<8x1xf32> to vector<1x8x1xf32>
    %cst_11 = arith.constant dense<0.000000e+00> : vector<1xf32>
    %34 = vector.multi_reduction <add>, %33, %cst_11 [1, 2] : vector<1x8x1xf32> to vector<1xf32>
    %35 = vector.shape_cast %34 : vector<1xf32> to vector<1x1x1xf32>
    %36 = vector.extract %35[0, 0, 0] : f32 from vector<1x1x1xf32>
    %37 = arith.addf %32, %36 : f32
    %c0_12 = arith.constant 0 : index
    %38 = memref.load %arg4[%c0_12] : memref<1xf32, #tpu.memory_space<smem>>
    memref.store %37, %arg4[%c0_12] : memref<1xf32, #tpu.memory_space<smem>>
    %c0_i32_13 = arith.constant 0 : i32
    %39 = arith.cmpi eq, %arg0, %c0_i32_13 : i32
    %40 = arith.extui %39 : i1 to i32
    %c0_i32_14 = arith.constant 0 : i32
    %41 = arith.cmpi ne, %40, %c0_i32_14 : i32
    scf.if %41 {
      %c0_15 = arith.constant 0 : index
      %42 = memref.load %arg4[%c0_15] : memref<1xf32, #tpu.memory_space<smem>>
      %cst_16 = arith.constant 8.000000e+00 : f32
      %43 = arith.divf %42, %cst_16 : f32
      %c0_17 = arith.constant 0 : index
      %44 = memref.load %arg3[%c0_17] : memref<1xf32, #tpu.memory_space<smem>>
      memref.store %43, %arg3[%c0_17] : memref<1xf32, #tpu.memory_space<smem>>
    } else {
    }
    return
  }
  func.func @transform_0(%arg0: i32) -> (i32, i32) {
    %c0_i32 = arith.constant 0 : i32
    %c0_i32_0 = arith.constant 0 : i32
    return %arg0, %c0_i32 : i32, i32
  }
  func.func @transform_1(%arg0: i32) -> (i32, i32) {
    %c0_i32 = arith.constant 0 : i32
    %c0_i32_0 = arith.constant 0 : i32
    return %arg0, %c0_i32 : i32, i32
  }
  func.func @transform_2(%arg0: i32) -> i32 {
    %c0_i32 = arith.constant 0 : i32
    %c0_i32_0 = arith.constant 0 : i32
    return %c0_i32 : i32
  }
}

</mosaic_0001>

<llo_original>
// kernel: tpu_custom_call.1
$region0: #{tpu_custom_call.1}
  #allocation0 [shape = 'u32[]', space=smem, size = 0x4, offset = 0x4, fixed_abs, tag = 'smem constant byte address 0x4 - core index']
  #allocation1 [shape = 'u32[144,128]{1,0:T(1,128)}', space=vmem, size = 0x12000, scoped, tag = 'internal scratch']
  #allocation2 [shape = 'f32[1]{0:T(128)}', space=smem, size = 0x200, scoped, tag = 'scratch operand']
  %s0 = inlined_call_operand.vmem [shape: f32[8,32], index: 0, kind: input, shape index: {}]
  %s1 = inlined_call_operand.vmem [shape: s32[8,1], index: 1, kind: input, shape index: {}]
  %s2 = inlined_call_operand.hbm [shape: f32[1], index: 2, kind: output, shape index: {}]
  %s3 = sld [smem:[#allocation0]]
  $region26: #{tpu_custom_call.1} parent=0
    _
  %s5 = ssub.s32 1, %s3
  %s6 = scalar_select 0, %s5, %s3
  $region1: #{tpu_custom_call.1} parent=0
    #allocation3 [shape = 'u8[512]{0}', space=smem, size = 0x200, scoped, tag = 'output window, operand 0, single buffered']
    #allocation4 [shape = 's32[1]{0}', space=sflag, size = 0x4, scoped, tag = 'scoped memory for tpu_custom_call.1']
    %7 = vsyncpa [#allocation4], 0
    // Predicated region
    $region2: #{tpu_custom_call.1} parent=1 // pred_check
      _
    $region3: #{tpu_custom_call.1} parent=1 // pred_check_branch
      %9 = sbr.rel (0) target = $region5
    $region4: #{tpu_custom_call.1} parent=1 // pred_region
      _
    $region5: #{tpu_custom_call.1} parent=1 // pred_fallthru
      _
    // Predicated region
    $region6: #{tpu_custom_call.1} parent=1 // pred_check
      _
    $region7: #{tpu_custom_call.1} parent=1 // pred_check_branch
      %11 = sbr.rel (0) target = $region9
    $region8: #{tpu_custom_call.1} parent=1 // pred_region
      _
    $region9: #{tpu_custom_call.1} parent=1 // pred_fallthru
      _
    %p12 = scmp.eq.s32.totalorder 0, 0
    // Predicated region
    $region10: #{tpu_custom_call.1} parent=1 // pred_check
      %p13 = pneg %p12
    $region11: #{tpu_custom_call.1} parent=1 // pred_check_branch
      %15 = sbr.rel (%p13) target = $region13
    $region12: #{tpu_custom_call.1} parent=1 // pred_region
      %s16 = scalar_lea.smem [#allocation2], 0
      %17 = sst [smem:[%s16]] 0.0
    $region13: #{tpu_custom_call.1} parent=1 // pred_fallthru
      _
    %v18 = vld [vmem:[%s0] sm:$0xff]
    %v19 = vmul.f32 %v18, 10.0
    %vm20 = vcmask 261120
    %v21 = vsel %vm20, %v19, -inf
    %22 = vmax.xlane.f32.xlu0 %v21
    %v23 = vpop.xlane.xlu0 %22
    %v24 = vsub.f32 %v19, %v23
    %v25 = vmul.f32 %v24, 1.442695
    %v26 = vpow.pop %v25
    %v27 = vsel %vm20, %v26, 0.0
    %28 = vadd.xlane.f32.xlu0 %v27
    %v29 = vpop.xlane.xlu0 %28
    %v30 = vlog2.pop %v29
    %v31 = vmul.f32 %v30, 0.6931472
    %v32 = vadd.f32 %v31, %v23
    %v33 = vld [vmem:[%s1] sm:$0xff]
    %v34 = vlaneseq
    %v35 = vand.u32 %v34, 127
    %36 = vset.pattern.permute.xlu0 0
    %37 = vperm.xlu0 %36, %v33
    %v38 = vpop.permute.xlu0 %37
    %vm39 = vcmp.eq.s32.totalorder %v35, %v38
    %v40 = vsel %vm39, %v19, 0.0
    %v41 = vsel %vm20, %v40, 0.0
    %42 = vadd.xlane.f32.xlu0 %v41
    %v43 = vpop.xlane.xlu0 %42
    %v44 = vsub.f32 %v32, %v43
    %s45 = smul.u32 0, 8
    %v46 = vlaneseq
    %v47 = vshrl.u32 %v46, 7
    %v48 = vstv %s45
    %v49 = vadd.s32 %v48, %v47
    %vm50 = vcmp.lt.s32.totalorder %v49, 8
    %v51 = vsel %vm50, %v44, 0.0
    %s52 = sld [smem:[#allocation2]]
    %vm53 = vcmask 7168
    %v54 = vsel %vm53, %v51, 0.0
    %55 = vadd.xlane.f32.xlu0 %v54
    %v56 = vpop.xlane.xlu0 %55
    %v57 = vrot.slane %v56, 4
    %v58 = vadd.f32 %v56, %v57
    %v59 = vrot.slane %v58, 2
    %v60 = vadd.f32 %v58, %v59
    %v61 = vrot.slane %v60, 1
    %v62 = vadd.f32 %v60, %v61
    %s63 = vtos %v62
    %s64 = sadd.f32 %s52, %s63
    %s65 = scalar_lea.smem [#allocation2], 0
    %66 = sst [smem:[%s65]] %s64
    // Predicated region
    $region14: #{tpu_custom_call.1} parent=1 // pred_check
      %p67 = pneg %p12
    $region15: #{tpu_custom_call.1} parent=1 // pred_check_branch
      %69 = sbr.rel (%p67) target = $region17
    $region16: #{tpu_custom_call.1} parent=1 // pred_region
      %s70 = sld [smem:[#allocation2]]
      %v71 = vrcp.pop 8.0
      %s72 = vtos %v71
      %s73 = smul.f32 %s70, %s72
      %s74 = scalar_lea.smem [#allocation3], 0
      %75 = sst [smem:[%s74]] %s73
    $region17: #{tpu_custom_call.1} parent=1 // pred_fallthru
      _
    // Predicated region
    $region18: #{tpu_custom_call.1} parent=1 // pred_check
      _
    $region19: #{tpu_custom_call.1} parent=1 // pred_check_branch
      %77 = sbr.rel (0) target = $region21
    $region20: #{tpu_custom_call.1} parent=1 // pred_region
      %s79 = ssub.s32 16, 16
      %80 = vsyncadd [#allocation4], %s79
      %83 = dma.smem_to_hbm [#allocation3], 16, %s2, [#allocation4]
    $region21: #{tpu_custom_call.1} parent=1 // pred_fallthru
      _
    // Predicated region
    $region22: #{tpu_custom_call.1} parent=1 // pred_check
      _
    $region23: #{tpu_custom_call.1} parent=1 // pred_check_branch
      %85 = sbr.rel (0) target = $region25
    $region24: #{tpu_custom_call.1} parent=1 // pred_region
      %86 = dma.done [#allocation4], 16
    $region25: #{tpu_custom_call.1} parent=1 // pred_fallthru
      _
    %87 = sfence
    %88 = vsyncpa [#allocation4], 1

</llo_original>
